<compile_context>
chip_gen: v6e
topology: v6e:2x2x1
jax: 0.10.0
libtpu: 0.0.40
codegen_flags: <defaults>
</compile_context>

<pallas_src>
import functools

import jax
import jax.numpy as jnp
from jax.experimental import pallas as pl
from jax.experimental.pallas import tpu as pltpu

_LANE = 128
_SUBLANE = 8


def _round_up(x, m):
    return (x + m - 1) // m * m


def _cdiv(a, b):
    return (a + b - 1) // b


def _coupling_kernel(z_ref, w1_ref, b1_ref, w2_ref, b2_ref, wts_ref, bts_ref,
                     out_ref, *, w_lanes, ldj_lane, reverse, matmul_dtype):
    z = z_ref[...]                                     # (TB, W) f32

    # self._nn : Linear -> ReLU -> Linear -> ReLU
    # (mask is pre-folded into w1 in pack_coupling_params, so z feeds the MXU
    #  directly; padded lanes are zero and stay inert.)
    h = jnp.dot(z.astype(matmul_dtype), w1_ref[...],
                preferred_element_type=jnp.float32) + b1_ref[...]
    h = jnp.maximum(h, 0.0)
    h = jnp.dot(h.astype(matmul_dtype), w2_ref[...],
                preferred_element_type=jnp.float32) + b2_ref[...]
    h = jnp.maximum(h, 0.0)

    # Fused translation|scale head: one (H_pad, 2*W) matmul, lane-aligned slices.
    # (1 - mask) is pre-folded into wt/bt/ws/bs, so
    #   t == (1-m) * translation(h)        s == (1-m) * tanh(scale(h))
    ts = jnp.dot(h.astype(matmul_dtype), wts_ref[...],
                 preferred_element_type=jnp.float32) + bts_ref[...]
    t = ts[:, :w_lanes]
    s = jnp.tanh(ts[:, w_lanes:])
    es = jnp.exp(s)                 # == 1 on masked / padded lanes

    if not reverse:
        # z_out = m*z + (1-m)*(z*exp(s) + t)  ==  z*exp(s_folded) + t_folded
        z_new = z * es + t
        # Pack the per-row ldj delta into the spare padded lane `ldj_lane` of the
        # output tile -> no separate ldj output stream.
        ldj_delta = jnp.sum(s, axis=1, keepdims=True)          # (TB, 1)
        lane = jax.lax.broadcasted_iota(jnp.int32, z_new.shape, 1)
        out_ref[...] = jnp.where(lane == ldj_lane, ldj_delta, z_new)
    else:
        # z_out = m*z + (1-m)*(z - t)*exp(s)  ==  (z - t_folded)*exp(s_folded)
        # ldj is identically zero in reverse mode; handled in the wrapper.
        out_ref[...] = (z - t) * es


def pack_coupling_params(params, mask, *, matmul_dtype=jnp.bfloat16):
    """One-time packing of Coupling parameters for the Pallas kernel.

    Folds the binary mask into w1 and (1 - mask) into the translation/scale
    heads, zero-pads everything to lane-dense shapes (multiples of 128), fuses
    [wt|ws] / [bt|bs] into one head, and casts matmul operands to
    `matmul_dtype` (bf16 by default: MXU-native on v5e/v6e/v7x; accumulation
    stays f32 in the kernel; bf16 results match the f32 reference to ~1e-2,
    pass matmul_dtype=jnp.float32 for tight-tolerance uses).

    NOTE: the mask folds are exact only for a strictly 0/1 mask (which is what
    the Coupling module uses).  Call this ONCE outside the per-step hot path.
    """
    f32 = jnp.float32
    C, H = params["w1"].shape
    C_pad = _round_up(C, _LANE)
    H_pad = _round_up(H, _LANE)
    # The per-row log-det-jacobian delta rides in a spare padded output lane; if
    # C is already lane-dense, add one more lane block for it.
    W = C_pad if C < C_pad else C_pad + _LANE

    m = mask.astype(f32).reshape(C)
    inv_m = 1.0 - m

    w1 = params["w1"].astype(f32) * m[:, None]              # fold mask
    wt = params["wt"].astype(f32) * inv_m[None, :]          # fold (1 - mask)
    ws = params["ws"].astype(f32) * inv_m[None, :]
    bt = params["bt"].astype(f32) * inv_m
    bs = params["bs"].astype(f32) * inv_m

    w1_p = jnp.zeros((W, H_pad), matmul_dtype).at[:C, :H].set(
        w1.astype(matmul_dtype))
    b1_p = jnp.zeros((1, H_pad), f32).at[:, :H].set(
        params["b1"].astype(f32).reshape(1, H))
    w2_p = jnp.zeros((H_pad, H_pad), matmul_dtype).at[:H, :H].set(
        params["w2"].astype(matmul_dtype))
    b2_p = jnp.zeros((1, H_pad), f32).at[:, :H].set(
        params["b2"].astype(f32).reshape(1, H))
    wts_p = jnp.zeros((H_pad, 2 * W), matmul_dtype)
    wts_p = wts_p.at[:H, :C].set(wt.astype(matmul_dtype))
    wts_p = wts_p.at[:H, W:W + C].set(ws.astype(matmul_dtype))
    bts_p = jnp.zeros((1, 2 * W), f32)
    bts_p = bts_p.at[:, :C].set(bt.reshape(1, C))
    bts_p = bts_p.at[:, W:W + C].set(bs.reshape(1, C))

    return {"w1": w1_p, "b1": b1_p, "w2": w2_p, "b2": b2_p,
            "wts": wts_p, "bts": bts_p}


@functools.partial(jax.jit, static_argnames=("reverse", "block_b"))
def coupling_forward(z, ldj, packed, *, reverse=False, block_b=512):
    """Pallas implementation of Coupling.forward(z, ldj, reverse)."""
    f32 = jnp.float32
    B, C = z.shape
    W, H_pad = packed["w1"].shape
    ldj_lane = C                      # spare padded lane carrying the ldj delta
    matmul_dtype = packed["w1"].dtype

    # Batch tiling: keep per-step overhead low, give >=2 (even) grid steps so
    # v7x's two TensorCores both get work, and waste at most a few padded rows.
    B8 = _round_up(B, _SUBLANE)
    steps = _cdiv(B8, min(block_b, B8))
    if B8 >= 2 * _SUBLANE:
        steps = max(steps, 2)
    if steps > 1 and steps % 2:
        steps += 1
    TB = _round_up(_cdiv(B8, steps), _SUBLANE)
    B_pad = steps * TB

    # --- pad activations (zero rows / lanes are inert, see header note) -------
    if B_pad == B and W == C:
        z_p = z.astype(f32)
    else:
        z_p = jnp.zeros((B_pad, W), f32).at[:B, :C].set(z.astype(f32))

    kernel = functools.partial(_coupling_kernel, w_lanes=W, ldj_lane=ldj_lane,
                               reverse=reverse, matmul_dtype=matmul_dtype)

    def batch_spec(last):             # tiles that move with the batch axis
        return pl.BlockSpec((TB, last), lambda i: (i, 0))

    def resident_spec(shape):         # weights: constant index -> VMEM-resident
        # TODO(synk): on v7x (64 MiB VMEM) with very large H, pipeline_mode=
        # pl.Buffered(1) would avoid double-buffering these never-re-DMA'd blocks.
        return pl.BlockSpec(shape, lambda i: (0, 0))

    out_p = pl.pallas_call(
        kernel,
        out_shape=jax.ShapeDtypeStruct((B_pad, W), f32),
        grid=(steps,),
        in_specs=[
            batch_spec(W),                       # z
            resident_spec((W, H_pad)),           # w1 (mask folded in)
            resident_spec((1, H_pad)),           # b1
            resident_spec((H_pad, H_pad)),       # w2
            resident_spec((1, H_pad)),           # b2
            resident_spec((H_pad, 2 * W)),       # [wt | ws] ((1-mask) folded in)
            resident_spec((1, 2 * W)),           # [bt | bs] ((1-mask) folded in)
        ],
        out_specs=batch_spec(W),
        compiler_params=pltpu.CompilerParams(
            # batch axis is independent -> shard across both TCs on v7x
            dimension_semantics=("parallel",),
            vmem_limit_bytes=48 * 1024 * 1024),
    )(z_p, packed["w1"], packed["b1"], packed["w2"], packed["b2"],
      packed["wts"], packed["bts"])

    z_out = out_p[:B, :C]
    if reverse:
        ldj_out = jnp.zeros_like(ldj)
    else:
        ldj_out = ldj.astype(f32) + out_p[:B, ldj_lane]
    return z_out, ldj_out


def _reference(z, ldj, mask, params, reverse=False):
    """Pure-JAX reference mirroring the PyTorch Coupling.forward."""
    masked_z = z * mask
    h = jnp.maximum(masked_z @ params["w1"] + params["b1"], 0.0)
    h = jnp.maximum(h @ params["w2"] + params["b2"], 0.0)
    t = h @ params["wt"] + params["bt"]
    s = jnp.tanh(h @ params["ws"] + params["bs"])
    if not reverse:
        z_new = masked_z + (1.0 - mask) * (z * jnp.exp(s) + t)
        ldj_new = ldj + jnp.sum((1.0 - mask) * s, axis=1)
    else:
        z_new = masked_z + (1.0 - mask) * (z - t) * jnp.exp(s)
        ldj_new = jnp.zeros_like(ldj)
    return z_new, ldj_new


def _init_params(key, c_in, n_hidden):
    """Deterministic init. Shapes follow Coupling.__init__.
    NOTE: the module zero-inits the translation/scale heads; small nonzero
    deterministic values are used here so the full kernel path is exercised."""
    ks = jax.random.split(key, 8)

    def u(k, shape, fan_in):
        bound = 1.0 / jnp.sqrt(fan_in)
        return jax.random.uniform(k, shape, jnp.float32, -bound, bound)

    return {
        "w1": u(ks[0], (c_in, n_hidden), c_in),
        "b1": u(ks[1], (n_hidden,), c_in),
        "w2": u(ks[2], (n_hidden, n_hidden), n_hidden),
        "b2": u(ks[3], (n_hidden,), n_hidden),
        "wt": 0.1 * u(ks[4], (n_hidden, c_in), n_hidden),
        "bt": 0.1 * u(ks[5], (c_in,), n_hidden),
        "ws": 0.1 * u(ks[6], (n_hidden, c_in), n_hidden),
        "bs": 0.1 * u(ks[7], (c_in,), n_hidden),
    }


if __name__ == "__main__":
    B, C, H = 8, 16, 32      # batch, c_in, n_hidden (small synthetic sizes)
    key = jax.random.PRNGKey(0)
    k_z, k_l, k_p = jax.random.split(key, 3)

    z = jax.random.normal(k_z, (B, C), jnp.float32)
    ldj = 0.1 * jax.random.normal(k_l, (B,), jnp.float32)
    # alternating checkerboard-style mask over features, as in RealNVP coupling
    mask = (jnp.arange(C) % 2).astype(jnp.float32)
    params = _init_params(k_p, C, H)

    z_ref, ldj_ref = _reference(z, ldj, mask, params)

    # f32 matmul path: tight-tolerance check, forward and reverse branches
    packed_f32 = pack_coupling_params(params, mask, matmul_dtype=jnp.float32)
    z_out, ldj_out = coupling_forward(z, ldj, packed_f32)
    jax.block_until_ready((z_out, ldj_out))
    assert jnp.allclose(z_out, z_ref, atol=1e-5, rtol=1e-5), "z mismatch (f32)"
    assert jnp.allclose(ldj_out, ldj_ref, atol=1e-5, rtol=1e-5), "ldj mismatch (f32)"

    zr_out, ldjr_out = coupling_forward(z, ldj, packed_f32, reverse=True)
    zr_ref, ldjr_ref = _reference(z, ldj, mask, params, reverse=True)
    jax.block_until_ready((zr_out, ldjr_out))
    assert jnp.allclose(zr_out, zr_ref, atol=1e-5, rtol=1e-5), "z mismatch (reverse)"
    assert jnp.allclose(ldjr_out, ldjr_ref, atol=1e-5, rtol=1e-5), "ldj mismatch (reverse)"

    # default bf16 matmul path (MXU-native on v5e/v6e/v7x): loose tolerance
    packed_bf16 = pack_coupling_params(params, mask)
    z_bf, ldj_bf = coupling_forward(z, ldj, packed_bf16)
    jax.block_until_ready((z_bf, ldj_bf))
    assert jnp.allclose(z_bf, z_ref, atol=2e-2, rtol=2e-2), "z mismatch (bf16)"
    assert jnp.allclose(ldj_bf, ldj_ref, atol=2e-2, rtol=2e-2), "ldj mismatch (bf16)"

    print("KERNEL_OK")
</pallas_src>

<mosaic_0001>
module attributes {stable_mosaic.version = 11 : i64} {
  func.func @_coupling_kernel(%arg0: i32, %arg1: memref<8x128xf32, #tpu.memory_space<vmem>>, %arg2: memref<128x128xf32, #tpu.memory_space<vmem>>, %arg3: memref<1x128xf32, #tpu.memory_space<vmem>>, %arg4: memref<128x128xf32, #tpu.memory_space<vmem>>, %arg5: memref<1x128xf32, #tpu.memory_space<vmem>>, %arg6: memref<128x256xf32, #tpu.memory_space<vmem>>, %arg7: memref<1x256xf32, #tpu.memory_space<vmem>>, %arg8: memref<8x128xf32, #tpu.memory_space<vmem>>) attributes {dimension_semantics = [#tpu.dimension_semantics<parallel>], iteration_bounds = array<i64: 1>, scalar_prefetch = 0 : i64, scratch_operands = 0 : i64, tpu.core_type = #tpu.core_type<tc>, window_params = [{transform_indices = @transform_0, window_bounds = array<i64: 8, 128>}, {pipeline_mode = #tpu.pipeline_mode<synchronous>, transform_indices = @transform_1, window_bounds = array<i64: 128, 128>}, {pipeline_mode = #tpu.pipeline_mode<synchronous>, transform_indices = @transform_2, window_bounds = array<i64: 1, 128>}, {pipeline_mode = #tpu.pipeline_mode<synchronous>, transform_indices = @transform_3, window_bounds = array<i64: 128, 128>}, {pipeline_mode = #tpu.pipeline_mode<synchronous>, transform_indices = @transform_4, window_bounds = array<i64: 1, 128>}, {pipeline_mode = #tpu.pipeline_mode<synchronous>, transform_indices = @transform_5, window_bounds = array<i64: 128, 256>}, {pipeline_mode = #tpu.pipeline_mode<synchronous>, transform_indices = @transform_6, window_bounds = array<i64: 1, 256>}, {transform_indices = @transform_7, window_bounds = array<i64: 8, 128>}]} {
    %c0 = arith.constant 0 : index
    %c0_0 = arith.constant 0 : index
    %0 = vector.load %arg1[%c0, %c0_0] : memref<8x128xf32, #tpu.memory_space<vmem>>, vector<8x128xf32>
    %c0_1 = arith.constant 0 : index
    %c0_2 = arith.constant 0 : index
    %1 = vector.load %arg2[%c0_1, %c0_2] : memref<128x128xf32, #tpu.memory_space<vmem>>, vector<128x128xf32>
    %cst = arith.constant dense<0.000000e+00> : vector<8x128xf32>
    %2 = tpu.matmul %0, %1, %cst {dimension_numbers = #tpu.dot_dimension_numbers<[1], [0], [0], [1], [0, 0, 1, 1], [], []>} : vector<8x128xf32>, vector<128x128xf32>, vector<8x128xf32> -> vector<8x128xf32>
    %c0_3 = arith.constant 0 : index
    %c0_4 = arith.constant 0 : index
    %3 = vector.load %arg3[%c0_3, %c0_4] : memref<1x128xf32, #tpu.memory_space<vmem>>, vector<1x128xf32>
    %4 = vector.broadcast %3 : vector<1x128xf32> to vector<8x128xf32>
    %5 = arith.addf %2, %4 : vector<8x128xf32>
    %cst_5 = arith.constant 0.000000e+00 : f32
    %6 = vector.broadcast %cst_5 : f32 to vector<8x128xf32>
    %7 = arith.maximumf %5, %6 : vector<8x128xf32>
    %c0_6 = arith.constant 0 : index
    %c0_7 = arith.constant 0 : index
    %8 = vector.load %arg4[%c0_6, %c0_7] : memref<128x128xf32, #tpu.memory_space<vmem>>, vector<128x128xf32>
    %cst_8 = arith.constant dense<0.000000e+00> : vector<8x128xf32>
    %9 = tpu.matmul %7, %8, %cst_8 {dimension_numbers = #tpu.dot_dimension_numbers<[1], [0], [0], [1], [0, 0, 1, 1], [], []>} : vector<8x128xf32>, vector<128x128xf32>, vector<8x128xf32> -> vector<8x128xf32>
    %c0_9 = arith.constant 0 : index
    %c0_10 = arith.constant 0 : index
    %10 = vector.load %arg5[%c0_9, %c0_10] : memref<1x128xf32, #tpu.memory_space<vmem>>, vector<1x128xf32>
    %11 = vector.broadcast %10 : vector<1x128xf32> to vector<8x128xf32>
    %12 = arith.addf %9, %11 : vector<8x128xf32>
    %cst_11 = arith.constant 0.000000e+00 : f32
    %13 = vector.broadcast %cst_11 : f32 to vector<8x128xf32>
    %14 = arith.maximumf %12, %13 : vector<8x128xf32>
    %c0_12 = arith.constant 0 : index
    %c0_13 = arith.constant 0 : index
    %15 = vector.load %arg6[%c0_12, %c0_13] : memref<128x256xf32, #tpu.memory_space<vmem>>, vector<128x256xf32>
    %cst_14 = arith.constant dense<0.000000e+00> : vector<8x256xf32>
    %16 = tpu.matmul %14, %15, %cst_14 {dimension_numbers = #tpu.dot_dimension_numbers<[1], [0], [0], [1], [0, 0, 1, 1], [], []>} : vector<8x128xf32>, vector<128x256xf32>, vector<8x256xf32> -> vector<8x256xf32>
    %c0_15 = arith.constant 0 : index
    %c0_16 = arith.constant 0 : index
    %17 = vector.load %arg7[%c0_15, %c0_16] : memref<1x256xf32, #tpu.memory_space<vmem>>, vector<1x256xf32>
    %18 = vector.broadcast %17 : vector<1x256xf32> to vector<8x256xf32>
    %19 = arith.addf %16, %18 : vector<8x256xf32>
    %20 = vector.extract_strided_slice %19 {offsets = [0, 0], sizes = [8, 128], strides = [1, 1]} : vector<8x256xf32> to vector<8x128xf32>
    %21 = vector.extract_strided_slice %19 {offsets = [0, 128], sizes = [8, 128], strides = [1, 1]} : vector<8x256xf32> to vector<8x128xf32>
    %22 = math.tanh %21 : vector<8x128xf32>
    %23 = math.exp %22 : vector<8x128xf32>
    %24 = arith.mulf %0, %23 : vector<8x128xf32>
    %25 = arith.addf %24, %20 : vector<8x128xf32>
    %cst_17 = arith.constant dense<0.000000e+00> : vector<8xf32>
    %26 = vector.multi_reduction <add>, %22, %cst_17 [1] : vector<8x128xf32> to vector<8xf32>
    %27 = vector.shape_cast %26 : vector<8xf32> to vector<8x1xf32>
    %28 = tpu.iota {dimensions = array<i32: 1>} : vector<8x128xi32>
    %c16_i32 = arith.constant 16 : i32
    %29 = vector.broadcast %c16_i32 : i32 to vector<8x128xi32>
    %30 = arith.cmpi eq, %28, %29 : vector<8x128xi32>
    %31 = vector.shape_cast %27 : vector<8x1xf32> to vector<8x1xf32>
    %32 = vector.broadcast %31 : vector<8x1xf32> to vector<8x128xf32>
    %33 = arith.select %30, %32, %25 : vector<8x128xi1>, vector<8x128xf32>
    %c0_18 = arith.constant 0 : index
    %c0_19 = arith.constant 0 : index
    %34 = vector.load %arg8[%c0_18, %c0_19] : memref<8x128xf32, #tpu.memory_space<vmem>>, vector<8x128xf32>
    tpu.vector_store %arg8[%c0_18, %c0_19], %33 {strides = array<i32>} : memref<8x128xf32, #tpu.memory_space<vmem>>, vector<8x128xf32>,
    return
  }
  func.func @transform_0(%arg0: i32) -> (i32, i32) {
    %c0_i32 = arith.constant 0 : i32
    %c0_i32_0 = arith.constant 0 : i32
    return %arg0, %c0_i32 : i32, i32
  }
  func.func @transform_1(%arg0: i32) -> (i32, i32) {
    %c0_i32 = arith.constant 0 : i32
    %c0_i32_0 = arith.constant 0 : i32
    %c0_i32_1 = arith.constant 0 : i32
    return %c0_i32, %c0_i32_0 : i32, i32
  }
  func.func @transform_2(%arg0: i32) -> (i32, i32) {
    %c0_i32 = arith.constant 0 : i32
    %c0_i32_0 = arith.constant 0 : i32
    %c0_i32_1 = arith.constant 0 : i32
    return %c0_i32, %c0_i32_0 : i32, i32
  }
  func.func @transform_3(%arg0: i32) -> (i32, i32) {
    %c0_i32 = arith.constant 0 : i32
    %c0_i32_0 = arith.constant 0 : i32
    %c0_i32_1 = arith.constant 0 : i32
    return %c0_i32, %c0_i32_0 : i32, i32
  }
  func.func @transform_4(%arg0: i32) -> (i32, i32) {
    %c0_i32 = arith.constant 0 : i32
    %c0_i32_0 = arith.constant 0 : i32
    %c0_i32_1 = arith.constant 0 : i32
    return %c0_i32, %c0_i32_0 : i32, i32
  }
  func.func @transform_5(%arg0: i32) -> (i32, i32) {
    %c0_i32 = arith.constant 0 : i32
    %c0_i32_0 = arith.constant 0 : i32
    %c0_i32_1 = arith.constant 0 : i32
    return %c0_i32, %c0_i32_0 : i32, i32
  }
  func.func @transform_6(%arg0: i32) -> (i32, i32) {
    %c0_i32 = arith.constant 0 : i32
    %c0_i32_0 = arith.constant 0 : i32
    %c0_i32_1 = arith.constant 0 : i32
    return %c0_i32, %c0_i32_0 : i32, i32
  }
  func.func @transform_7(%arg0: i32) -> (i32, i32) {
    %c0_i32 = arith.constant 0 : i32
    %c0_i32_0 = arith.constant 0 : i32
    return %arg0, %c0_i32 : i32, i32
  }
}

</mosaic_0001>

<llo_original>
// kernel: coupling_forward.1
$region0: #{coupling_forward.1}
  #allocation0 [shape = 'u32[]', space=smem, size = 0x4, offset = 0x4, fixed_abs, tag = 'smem constant byte address 0x4 - core index']
  #allocation1 [shape = 'u32[144,128]{1,0:T(1,128)}', space=vmem, size = 0x12000, scoped, tag = 'internal scratch']
  %s0 = inlined_call_operand.vmem [shape: f32[8,128], index: 0, kind: input, shape index: {}]
  %s1 = inlined_call_operand.hbm [shape: f32[128,128], index: 1, kind: input, shape index: {}]
  %s2 = inlined_call_operand.vmem [shape: f32[1,128], index: 2, kind: input, shape index: {}]
  %s3 = inlined_call_operand.hbm [shape: f32[128,128], index: 3, kind: input, shape index: {}]
  %s4 = inlined_call_operand.vmem [shape: f32[1,128], index: 4, kind: input, shape index: {}]
  %s5 = inlined_call_operand.hbm [shape: f32[128,256], index: 5, kind: input, shape index: {}]
  %s6 = inlined_call_operand.vmem [shape: f32[1,256], index: 6, kind: input, shape index: {}]
  %s7 = inlined_call_operand.vmem [shape: f32[8,128], index: 7, kind: output, shape index: {}]
  %s8 = sld [smem:[#allocation0]]
  $region50: #{coupling_forward.1} parent=0
    _
  %s10 = ssub.s32 1, %s8
  %s11 = scalar_select 0, %s10, %s8
  $region1: #{coupling_forward.1} parent=0
    #allocation2 [shape = 'u8[65536]{0}', space=vmem, size = 0x10000, scoped, tag = 'input window, operand 1, single buffered']
    #allocation3 [shape = 's32[1]{0}', space=sflag, size = 0x4, scoped, tag = 'scoped memory for coupling_forward.1']
    #allocation4 [shape = 'u8[65536]{0}', space=vmem, size = 0x10000, scoped, tag = 'input window, operand 3, single buffered']
    #allocation5 [shape = 's32[1]{0}', space=sflag, size = 0x4, scoped, tag = 'scoped memory for coupling_forward.1']
    #allocation6 [shape = 'u8[131072]{0}', space=vmem, size = 0x20000, scoped, tag = 'input window, operand 5, single buffered']
    %12 = vsyncpa [#allocation3], 0
    %13 = vsyncpa [#allocation5], 0
    // Predicated region
    $region2: #{coupling_forward.1} parent=1 // pred_check
      _
    $region3: #{coupling_forward.1} parent=1 // pred_check_branch
      %15 = sbr.rel (0) target = $region5
    $region4: #{coupling_forward.1} parent=1 // pred_region
      _
    $region5: #{coupling_forward.1} parent=1 // pred_fallthru
      _
    // Predicated region
    $region6: #{coupling_forward.1} parent=1 // pred_check
      _
    $region7: #{coupling_forward.1} parent=1 // pred_check_branch
      %17 = sbr.rel (0) target = $region9
    $region8: #{coupling_forward.1} parent=1 // pred_region
      %s19 = ssub.s32 2048, 2048
      %20 = vsyncadd [#allocation3], %s19
      %s21 = sshll.u32 [#allocation2], 4
      %s22 = int_to_ptr.vmem [resolvable:$true] %s21
      %27 = dma.hbm_to_vmem [thread:$0]  %s1, 2048, %s22, [#allocation3], 128, 128, 8
    $region9: #{coupling_forward.1} parent=1 // pred_fallthru
      _
    // Predicated region
    $region10: #{coupling_forward.1} parent=1 // pred_check
      _
    $region11: #{coupling_forward.1} parent=1 // pred_check_branch
      %29 = sbr.rel (0) target = $region13
    $region12: #{coupling_forward.1} parent=1 // pred_region
      _
    $region13: #{coupling_forward.1} parent=1 // pred_fallthru
      _
    // Predicated region
    $region14: #{coupling_forward.1} parent=1 // pred_check
      _
    $region15: #{coupling_forward.1} parent=1 // pred_check_branch
      %31 = sbr.rel (0) target = $region17
    $region16: #{coupling_forward.1} parent=1 // pred_region
      %s33 = ssub.s32 2048, 2048
      %34 = vsyncadd [#allocation5], %s33
      %s35 = sshll.u32 [#allocation4], 4
      %s36 = int_to_ptr.vmem [resolvable:$true] %s35
      %41 = dma.hbm_to_vmem [thread:$0]  %s3, 2048, %s36, [#allocation5], 128, 128, 8
    $region17: #{coupling_forward.1} parent=1 // pred_fallthru
      _
    // Predicated region
    $region18: #{coupling_forward.1} parent=1 // pred_check
      _
    $region19: #{coupling_forward.1} parent=1 // pred_check_branch
      %43 = sbr.rel (0) target = $region21
    $region20: #{coupling_forward.1} parent=1 // pred_region
      _
    $region21: #{coupling_forward.1} parent=1 // pred_fallthru
      _
    // Predicated region
    $region22: #{coupling_forward.1} parent=1 // pred_check
      _
    $region23: #{coupling_forward.1} parent=1 // pred_check_branch
      %45 = sbr.rel (0) target = $region25
    $region24: #{coupling_forward.1} parent=1 // pred_region
      %s47 = ssub.s32 4096, 4096
      %48 = vsyncadd [#allocation5], %s47
      %s49 = sshll.u32 [#allocation6], 4
      %s50 = int_to_ptr.vmem [resolvable:$true] %s49
      %55 = dma.hbm_to_vmem [thread:$0]  %s5, 4096, %s50, [#allocation5], 256, 256, 16
    $region25: #{coupling_forward.1} parent=1 // pred_fallthru
      _
    // Predicated region
    $region26: #{coupling_forward.1} parent=1 // pred_check
      _
    $region27: #{coupling_forward.1} parent=1 // pred_check_branch
      %57 = sbr.rel (0) target = $region29
    $region28: #{coupling_forward.1} parent=1 // pred_region
      _
    $region29: #{coupling_forward.1} parent=1 // pred_fallthru
      _
    // Predicated region
    $region30: #{coupling_forward.1} parent=1 // pred_check
      _
    $region31: #{coupling_forward.1} parent=1 // pred_check_branch
      %59 = sbr.rel (0) target = $region33
    $region32: #{coupling_forward.1} parent=1 // pred_region
      %60 = dma.done [#allocation3], 2048
    $region33: #{coupling_forward.1} parent=1 // pred_fallthru
      _
    // Predicated region
    $region34: #{coupling_forward.1} parent=1 // pred_check
      _
    $region35: #{coupling_forward.1} parent=1 // pred_check_branch
      %62 = sbr.rel (0) target = $region37
    $region36: #{coupling_forward.1} parent=1 // pred_region
      %63 = dma.done [#allocation5], 2048
    $region37: #{coupling_forward.1} parent=1 // pred_fallthru
      _
    // Predicated region
    $region38: #{coupling_forward.1} parent=1 // pred_check
      _
    $region39: #{coupling_forward.1} parent=1 // pred_check_branch
      %65 = sbr.rel (0) target = $region41
    $region40: #{coupling_forward.1} parent=1 // pred_region
      %66 = dma.done [#allocation5], 4096
    $region41: #{coupling_forward.1} parent=1 // pred_fallthru
      _
    %v67 = vld [vmem:[%s0] sm:$0xff]
    %v68 = vld [vmem:[#allocation2] sm:$0xff]
    %v69 = vld [vmem:[#allocation2 + $0x8] sm:$0xff]
    %v70 = vld [vmem:[#allocation2 + $0x10] sm:$0xff]
    %v71 = vld [vmem:[#allocation2 + $0x18] sm:$0xff]
    %v72 = vld [vmem:[#allocation2 + $0x20] sm:$0xff]
    %v73 = vld [vmem:[#allocation2 + $0x28] sm:$0xff]
    %v74 = vld [vmem:[#allocation2 + $0x30] sm:$0xff]
    %v75 = vld [vmem:[#allocation2 + $0x38] sm:$0xff]
    %v76 = vld [vmem:[#allocation2 + $0x40] sm:$0xff]
    %v77 = vld [vmem:[#allocation2 + $0x48] sm:$0xff]
    %v78 = vld [vmem:[#allocation2 + $0x50] sm:$0xff]
    %v79 = vld [vmem:[#allocation2 + $0x58] sm:$0xff]
    %v80 = vld [vmem:[#allocation2 + $0x60] sm:$0xff]
    %v81 = vld [vmem:[#allocation2 + $0x68] sm:$0xff]
    %v82 = vld [vmem:[#allocation2 + $0x70] sm:$0xff]
    %v83 = vld [vmem:[#allocation2 + $0x78] sm:$0xff]
    %v84 = vld [vmem:[%s2] sm:$0x1]
    %v86 = vlaneseq
    %v87 = vshrl.u32 %v86, 7
    %v88 = vsub.s32 0, %v87
    %v89 = vrot.slane %v84, %v88
    %91 = vmatprep.subr.mxu0 0.0
    %92 = vmatpush1.msra.mxu0 %v83
    %93 = vmatprep.subr.mxu0 0.0
    %94 = vmatpush1.msra.mxu0 %v82
    %95 = vmatprep.subr.mxu0 0.0
    %96 = vmatpush1.msra.mxu0 %v81
    %97 = vmatprep.subr.mxu0 0.0
    %98 = vmatpush1.msra.mxu0 %v80
    %99 = vmatprep.subr.mxu0 0.0
    %100 = vmatpush1.msra.mxu0 %v79
    %101 = vmatprep.subr.mxu0 0.0
    %102 = vmatpush1.msra.mxu0 %v78
    %103 = vmatprep.subr.mxu0 0.0
    %104 = vmatpush1.msra.mxu0 %v77
    %105 = vmatprep.subr.mxu0 0.0
    %106 = vmatpush1.msra.mxu0 %v76
    %107 = vmatprep.subr.mxu0 0.0
    %108 = vmatpush1.msra.mxu0 %v75
    %109 = vmatprep.subr.mxu0 0.0
    %110 = vmatpush1.msra.mxu0 %v74
    %111 = vmatprep.subr.mxu0 0.0
    %112 = vmatpush1.msra.mxu0 %v73
    %113 = vmatprep.subr.mxu0 0.0
    %114 = vmatpush1.msra.mxu0 %v72
    %115 = vmatprep.subr.mxu0 0.0
    %116 = vmatpush1.msra.mxu0 %v71
    %117 = vmatprep.subr.mxu0 0.0
    %118 = vmatpush1.msra.mxu0 %v70
    %119 = vmatprep.subr.mxu0 0.0
    %120 = vmatpush1.msra.mxu0 %v69
    %121 = vmatprep.subr.mxu0 0.0
    %122 = vmatpush1.msra.mxu0 %v68
    %123 = vmatprep.subr.mxu0 0.0
    %124 = vmatpush2.msra.mxu0 0.0
    %125 = vmatprep.subr.mxu0 0.0
    %126 = vmatpush2.msra.mxu0 0.0
    %127 = vmatprep.subr.mxu0 0.0
    %128 = vmatpush2.msra.mxu0 0.0
    %129 = vmatprep.subr.mxu0 0.0
    %130 = vmatpush2.msra.mxu0 0.0
    %131 = vmatprep.subr.mxu0 0.0
    %132 = vmatpush2.msra.mxu0 0.0
    %133 = vmatprep.subr.mxu0 0.0
    %134 = vmatpush2.msra.mxu0 0.0
    %135 = vmatprep.subr.mxu0 0.0
    %136 = vmatpush2.msra.mxu0 0.0
    %137 = vmatprep.subr.mxu0 0.0
    %138 = vmatpush2.msra.mxu0 0.0
    %139 = vmatprep.subr.mxu0 0.0
    %140 = vmatpush2.msra.mxu0 0.0
    %141 = vmatprep.subr.mxu0 0.0
    %142 = vmatpush2.msra.mxu0 0.0
    %143 = vmatprep.subr.mxu0 0.0
    %144 = vmatpush2.msra.mxu0 0.0
    %145 = vmatprep.subr.mxu0 0.0
    %146 = vmatpush2.msra.mxu0 0.0
    %147 = vmatprep.subr.mxu0 0.0
    %148 = vmatpush2.msra.mxu0 0.0
    %149 = vmatprep.subr.mxu0 0.0
    %150 = vmatpush2.msra.mxu0 0.0
    %151 = vmatprep.subr.mxu0 0.0
    %152 = vmatpush2.msra.mxu0 0.0
    %153 = vmatprep.subr.mxu0 0.0
    %154 = vmatpush2.msra.mxu0 0.0
    %155 = vmatprep.mubr.f32.mxu0 0.0
    %156 = vmatmul.mubr.f32.gmra.mxu0 %v67
    %v157 = vpop.f32.mrf.mxu0
    %v158 = vadd.f32 %v89, %v157
    %v159 = vpop.f32.mrf.mxu0
    %160 = vdwg.mxu0
    %v161 = vmax.f32 %v158, 0.0
    %v162 = vld [vmem:[#allocation4] sm:$0xff]
    %v163 = vld [vmem:[#allocation4 + $0x8] sm:$0xff]
    %v164 = vld [vmem:[#allocation4 + $0x10] sm:$0xff]
    %v165 = vld [vmem:[#allocation4 + $0x18] sm:$0xff]
    %v166 = vld [vmem:[#allocation4 + $0x20] sm:$0xff]
    %v167 = vld [vmem:[#allocation4 + $0x28] sm:$0xff]
    %v168 = vld [vmem:[#allocation4 + $0x30] sm:$0xff]
    %v169 = vld [vmem:[#allocation4 + $0x38] sm:$0xff]
    %v170 = vld [vmem:[#allocation4 + $0x40] sm:$0xff]
    %v171 = vld [vmem:[#allocation4 + $0x48] sm:$0xff]
    %v172 = vld [vmem:[#allocation4 + $0x50] sm:$0xff]
    %v173 = vld [vmem:[#allocation4 + $0x58] sm:$0xff]
    %v174 = vld [vmem:[#allocation4 + $0x60] sm:$0xff]
    %v175 = vld [vmem:[#allocation4 + $0x68] sm:$0xff]
    %v176 = vld [vmem:[#allocation4 + $0x70] sm:$0xff]
    %v177 = vld [vmem:[#allocation4 + $0x78] sm:$0xff]
    %v178 = vld [vmem:[%s4] sm:$0x1]
    %v180 = vlaneseq
    %v181 = vshrl.u32 %v180, 7
    %v182 = vsub.s32 0, %v181
    %v183 = vrot.slane %v178, %v182
    %185 = vmatprep.subr.mxu0 0.0
    %186 = vmatpush1.msra.mxu0 %v177
    %187 = vmatprep.subr.mxu0 0.0
    %188 = vmatpush1.msra.mxu0 %v176
    %189 = vmatprep.subr.mxu0 0.0
    %190 = vmatpush1.msra.mxu0 %v175
    %191 = vmatprep.subr.mxu0 0.0
    %192 = vmatpush1.msra.mxu0 %v174
    %193 = vmatprep.subr.mxu0 0.0
    %194 = vmatpush1.msra.mxu0 %v173
    %195 = vmatprep.subr.mxu0 0.0
    %196 = vmatpush1.msra.mxu0 %v172
    %197 = vmatprep.subr.mxu0 0.0
    %198 = vmatpush1.msra.mxu0 %v171
    %199 = vmatprep.subr.mxu0 0.0
    %200 = vmatpush1.msra.mxu0 %v170
    %201 = vmatprep.subr.mxu0 0.0
    %202 = vmatpush1.msra.mxu0 %v169
    %203 = vmatprep.subr.mxu0 0.0
    %204 = vmatpush1.msra.mxu0 %v168
    %205 = vmatprep.subr.mxu0 0.0
    %206 = vmatpush1.msra.mxu0 %v167
    %207 = vmatprep.subr.mxu0 0.0
    %208 = vmatpush1.msra.mxu0 %v166
    %209 = vmatprep.subr.mxu0 0.0
    %210 = vmatpush1.msra.mxu0 %v165
    %211 = vmatprep.subr.mxu0 0.0
    %212 = vmatpush1.msra.mxu0 %v164
    %213 = vmatprep.subr.mxu0 0.0
    %214 = vmatpush1.msra.mxu0 %v163
    %215 = vmatprep.subr.mxu0 0.0
    %216 = vmatpush1.msra.mxu0 %v162
    %217 = vmatprep.subr.mxu0 0.0
    %218 = vmatpush2.msra.mxu0 0.0
    %219 = vmatprep.subr.mxu0 0.0
    %220 = vmatpush2.msra.mxu0 0.0
    %221 = vmatprep.subr.mxu0 0.0
    %222 = vmatpush2.msra.mxu0 0.0
    %223 = vmatprep.subr.mxu0 0.0
    %224 = vmatpush2.msra.mxu0 0.0
    %225 = vmatprep.subr.mxu0 0.0
    %226 = vmatpush2.msra.mxu0 0.0
    %227 = vmatprep.subr.mxu0 0.0
    %228 = vmatpush2.msra.mxu0 0.0
    %229 = vmatprep.subr.mxu0 0.0
    %230 = vmatpush2.msra.mxu0 0.0
    %231 = vmatprep.subr.mxu0 0.0
    %232 = vmatpush2.msra.mxu0 0.0
    %233 = vmatprep.subr.mxu0 0.0
    %234 = vmatpush2.msra.mxu0 0.0
    %235 = vmatprep.subr.mxu0 0.0
    %236 = vmatpush2.msra.mxu0 0.0
    %237 = vmatprep.subr.mxu0 0.0
    %238 = vmatpush2.msra.mxu0 0.0
    %239 = vmatprep.subr.mxu0 0.0
    %240 = vmatpush2.msra.mxu0 0.0
    %241 = vmatprep.subr.mxu0 0.0
    %242 = vmatpush2.msra.mxu0 0.0
    %243 = vmatprep.subr.mxu0 0.0
    %244 = vmatpush2.msra.mxu0 0.0
    %245 = vmatprep.subr.mxu0 0.0
    %246 = vmatpush2.msra.mxu0 0.0
    %247 = vmatprep.subr.mxu0 0.0
    %248 = vmatpush2.msra.mxu0 0.0
    %249 = vmatprep.mubr.f32.mxu0 0.0
    %250 = vmatmul.mubr.f32.gmra.mxu0 %v161
    %v251 = vpop.f32.mrf.mxu0
    %v252 = vadd.f32 %v183, %v251
    %v253 = vpop.f32.mrf.mxu0
    %254 = vdwg.mxu0
    %v255 = vmax.f32 %v252, 0.0
    %v256 = vld [vmem:[#allocation6] sm:$0xff]
    %v257 = vld [vmem:[#allocation6 + $0x8] sm:$0xff]
    %v258 = vld [vmem:[#allocation6 + $0x10] sm:$0xff]
    %v259 = vld [vmem:[#allocation6 + $0x18] sm:$0xff]
    %v260 = vld [vmem:[#allocation6 + $0x20] sm:$0xff]
    %v261 = vld [vmem:[#allocation6 + $0x28] sm:$0xff]
    %v262 = vld [vmem:[#allocation6 + $0x30] sm:$0xff]
    %v263 = vld [vmem:[#allocation6 + $0x38] sm:$0xff]
    %v264 = vld [vmem:[#allocation6 + $0x40] sm:$0xff]
    %v265 = vld [vmem:[#allocation6 + $0x48] sm:$0xff]
    %v266 = vld [vmem:[#allocation6 + $0x50] sm:$0xff]
    %v267 = vld [vmem:[#allocation6 + $0x58] sm:$0xff]
    %v268 = vld [vmem:[#allocation6 + $0x60] sm:$0xff]
    %v269 = vld [vmem:[#allocation6 + $0x68] sm:$0xff]
    %v270 = vld [vmem:[#allocation6 + $0x70] sm:$0xff]
    %v271 = vld [vmem:[#allocation6 + $0x78] sm:$0xff]
    %v272 = vld [vmem:[#allocation6 + $0x80] sm:$0xff]
    %v273 = vld [vmem:[#allocation6 + $0x88] sm:$0xff]
    %v274 = vld [vmem:[#allocation6 + $0x90] sm:$0xff]
    %v275 = vld [vmem:[#allocation6 + $0x98] sm:$0xff]
    %v276 = vld [vmem:[#allocation6 + $0xa0] sm:$0xff]
    %v277 = vld [vmem:[#allocation6 + $0xa8] sm:$0xff]
    %v278 = vld [vmem:[#allocation6 + $0xb0] sm:$0xff]
    %v279 = vld [vmem:[#allocation6 + $0xb8] sm:$0xff]
    %v280 = vld [vmem:[#allocation6 + $0xc0] sm:$0xff]
    %v281 = vld [vmem:[#allocation6 + $0xc8] sm:$0xff]
    %v282 = vld [vmem:[#allocation6 + $0xd0] sm:$0xff]
    %v283 = vld [vmem:[#allocation6 + $0xd8] sm:$0xff]
    %v284 = vld [vmem:[#allocation6 + $0xe0] sm:$0xff]
    %v285 = vld [vmem:[#allocation6 + $0xe8] sm:$0xff]
    %v286 = vld [vmem:[#allocation6 + $0xf0] sm:$0xff]
    %v287 = vld [vmem:[#allocation6 + $0xf8] sm:$0xff]
    %v288 = vld [vmem:[%s6] sm:$0x3]
    %v290 = vlaneseq
    %v291 = vshrl.u32 %v290, 7
    %v292 = vsub.s32 0, %v291
    %v293 = vrot.slane %v288, %v292
    %v294 = vlaneseq
    %v295 = vshrl.u32 %v294, 7
    %v296 = vsub.s32 1, %v295
    %v297 = vrot.slane %v288, %v296
    %300 = vmatprep.subr.mxu0 %v287
    %301 = vmatpush1.msra.mxu0 %v286
    %302 = vmatprep.subr.mxu0 %v285
    %303 = vmatpush1.msra.mxu0 %v284
    %304 = vmatprep.subr.mxu0 %v283
    %305 = vmatpush1.msra.mxu0 %v282
    %306 = vmatprep.subr.mxu0 %v281
    %307 = vmatpush1.msra.mxu0 %v280
    %308 = vmatprep.subr.mxu0 %v279
    %309 = vmatpush1.msra.mxu0 %v278
    %310 = vmatprep.subr.mxu0 %v277
    %311 = vmatpush1.msra.mxu0 %v276
    %312 = vmatprep.subr.mxu0 %v275
    %313 = vmatpush1.msra.mxu0 %v274
    %314 = vmatprep.subr.mxu0 %v273
    %315 = vmatpush1.msra.mxu0 %v272
    %316 = vmatprep.subr.mxu0 %v271
    %317 = vmatpush1.msra.mxu0 %v270
    %318 = vmatprep.subr.mxu0 %v269
    %319 = vmatpush1.msra.mxu0 %v268
    %320 = vmatprep.subr.mxu0 %v267
    %321 = vmatpush1.msra.mxu0 %v266
    %322 = vmatprep.subr.mxu0 %v265
    %323 = vmatpush1.msra.mxu0 %v264
    %324 = vmatprep.subr.mxu0 %v263
    %325 = vmatpush1.msra.mxu0 %v262
    %326 = vmatprep.subr.mxu0 %v261
    %327 = vmatpush1.msra.mxu0 %v260
    %328 = vmatprep.subr.mxu0 %v259
    %329 = vmatpush1.msra.mxu0 %v258
    %330 = vmatprep.subr.mxu0 %v257
    %331 = vmatpush1.msra.mxu0 %v256
    %332 = vmatprep.subr.mxu0 0.0
    %333 = vmatpush2.msra.mxu0 0.0
    %334 = vmatprep.subr.mxu0 0.0
    %335 = vmatpush2.msra.mxu0 0.0
    %336 = vmatprep.subr.mxu0 0.0
    %337 = vmatpush2.msra.mxu0 0.0
    %338 = vmatprep.subr.mxu0 0.0
    %339 = vmatpush2.msra.mxu0 0.0
    %340 = vmatprep.subr.mxu0 0.0
    %341 = vmatpush2.msra.mxu0 0.0
    %342 = vmatprep.subr.mxu0 0.0
    %343 = vmatpush2.msra.mxu0 0.0
    %344 = vmatprep.subr.mxu0 0.0
    %345 = vmatpush2.msra.mxu0 0.0
    %346 = vmatprep.subr.mxu0 0.0
    %347 = vmatpush2.msra.mxu0 0.0
    %348 = vmatprep.subr.mxu0 0.0
    %349 = vmatpush2.msra.mxu0 0.0
    %350 = vmatprep.subr.mxu0 0.0
    %351 = vmatpush2.msra.mxu0 0.0
    %352 = vmatprep.subr.mxu0 0.0
    %353 = vmatpush2.msra.mxu0 0.0
    %354 = vmatprep.subr.mxu0 0.0
    %355 = vmatpush2.msra.mxu0 0.0
    %356 = vmatprep.subr.mxu0 0.0
    %357 = vmatpush2.msra.mxu0 0.0
    %358 = vmatprep.subr.mxu0 0.0
    %359 = vmatpush2.msra.mxu0 0.0
    %360 = vmatprep.subr.mxu0 0.0
    %361 = vmatpush2.msra.mxu0 0.0
    %362 = vmatprep.subr.mxu0 0.0
    %363 = vmatpush2.msra.mxu0 0.0
    %364 = vmatprep.mubr.f32.mxu0 0.0
    %365 = vmatmul.mubr.f32.gmra.mxu0 %v255
    %v366 = vpop.f32.mrf.mxu0
    %v367 = vadd.f32 %v293, %v366
    %v368 = vpop.f32.mrf.mxu0
    %v369 = vadd.f32 %v297, %v368
    %370 = vdwg.mxu0
    %v371 = vtanh.pop %v369
    %v372 = vmul.f32 %v371, 1.442695
    %v373 = vpow.pop %v372
    %v374 = vmul.f32 %v67, %v373
    %v375 = vadd.f32 %v374, %v367
    %376 = vadd.xlane.f32.xlu0 %v371
    %v377 = vpop.xlane.xlu0 %376
    %v378 = vlaneseq
    %v379 = vand.u32 %v378, 127
    %vm380 = vcmp.eq.s32.totalorder %v379, 16
    %v381 = vsel %vm380, %v377, %v375
    %382 = vst [vmem:[%s7] sm:$0xff] %v381
    // Predicated region
    $region42: #{coupling_forward.1} parent=1 // pred_check
      _
    $region43: #{coupling_forward.1} parent=1 // pred_check_branch
      %384 = sbr.rel (0) target = $region45
    $region44: #{coupling_forward.1} parent=1 // pred_region
      _
    $region45: #{coupling_forward.1} parent=1 // pred_fallthru
      _
    // Predicated region
    $region46: #{coupling_forward.1} parent=1 // pred_check
      _
    $region47: #{coupling_forward.1} parent=1 // pred_check_branch
      %386 = sbr.rel (0) target = $region49
    $region48: #{coupling_forward.1} parent=1 // pred_region
      _
    $region49: #{coupling_forward.1} parent=1 // pred_fallthru
      _
    %387 = vsyncpa [#allocation3], 1
    %388 = vsyncpa [#allocation5], 1

</llo_original>
